<compile_context>
chip_gen: v5e
topology: v5e:2x2
jax: 0.10.0
libtpu: 0.0.40
codegen_flags: <defaults>
</compile_context>

<pallas_src>
import functools

import jax
import jax.numpy as jnp
from jax.experimental import pallas as pl
from jax.experimental.pallas import tpu as pltpu

EPS = 1e-5                      # PyTorch BatchNorm default eps
VMEM_LIMIT = 48 * 1024 * 1024   # < v7x 64 MiB physical VMEM; > 16/32 MiB default scoped limits


def _choose_tile(n, cap):
    """Largest multiple-of-8 divisor of n that is <= cap (fallback: n itself)."""
    if n <= cap:
        return n
    t = cap - (cap % 8)
    while t >= 8:
        if n % t == 0:
            return t
        t -= 8
    return n


def _conv1_fma(x, w1):
    """(rows, 3) @ (3, 64) as three VPU FMAs (K=3 would waste the MXU)."""
    return (x[:, 0:1] * w1[0:1, :]
            + x[:, 1:2] * w1[1:2, :]
            + x[:, 2:3] * w1[2:3, :])


# ---------------------------------------------------------------------------
# pass 1: conv1 pre-activation -> per-(b, channel) sum / sum-of-squares
# ---------------------------------------------------------------------------
def _conv1_stats_kernel(x_ref, w1_ref, sum_ref, sq_ref):
    n = pl.program_id(1)
    h1 = _conv1_fma(x_ref[0], w1_ref[...])                          # (tile_n, 64)

    @pl.when(n == 0)
    def _():
        sum_ref[...] = jnp.zeros_like(sum_ref)
        sq_ref[...] = jnp.zeros_like(sq_ref)

    sum_ref[...] += jnp.sum(h1, axis=0, keepdims=True)[None]
    sq_ref[...] += jnp.sum(h1 * h1, axis=0, keepdims=True)[None]


# ---------------------------------------------------------------------------
# pass 2: bn1 + relu -> conv2 pre-activation -> stats
# ---------------------------------------------------------------------------
def _conv2_stats_kernel(x_ref, w1_ref, sc1_ref, sh1_ref, w2_ref,
                        sum_ref, sq_ref, *, use_bf16):
    n = pl.program_id(1)
    h1 = _conv1_fma(x_ref[0], w1_ref[...])
    a1 = jnp.maximum(h1 * sc1_ref[...] + sh1_ref[...], 0.0)        # (tile_n, 64)
    w2 = w2_ref[...]
    if use_bf16:
        a1 = a1.astype(jnp.bfloat16)
        w2 = w2.astype(jnp.bfloat16)
    h2 = jnp.dot(a1, w2, preferred_element_type=jnp.float32)       # (tile_n, 128)

    @pl.when(n == 0)
    def _():
        sum_ref[...] = jnp.zeros_like(sum_ref)
        sq_ref[...] = jnp.zeros_like(sq_ref)

    sum_ref[...] += jnp.sum(h2, axis=0, keepdims=True)[None]
    sq_ref[...] += jnp.sum(h2 * h2, axis=0, keepdims=True)[None]


# ---------------------------------------------------------------------------
# pass 3: bn2 + relu -> conv3 pre-activation -> stats + running per-b max/min
# ---------------------------------------------------------------------------
def _conv3_pool_kernel(x_ref, w1_ref, sc1_ref, sh1_ref, w2_ref, sc2_ref,
                       sh2_ref, w3_ref,
                       sum_ref, sq_ref, maxh_ref, minh_ref, *, use_bf16):
    n = pl.program_id(1)
    h1 = _conv1_fma(x_ref[0], w1_ref[...])
    a1 = jnp.maximum(h1 * sc1_ref[...] + sh1_ref[...], 0.0)
    w2 = w2_ref[...]
    w3 = w3_ref[...]
    if use_bf16:
        a1 = a1.astype(jnp.bfloat16)
        w2 = w2.astype(jnp.bfloat16)
    h2 = jnp.dot(a1, w2, preferred_element_type=jnp.float32)
    a2 = jnp.maximum(h2 * sc2_ref[...] + sh2_ref[...], 0.0)        # (tile_n, 128)
    if use_bf16:
        a2 = a2.astype(jnp.bfloat16)
        w3 = w3.astype(jnp.bfloat16)
    h3 = jnp.dot(a2, w3, preferred_element_type=jnp.float32)       # (tile_n, 1024)

    @pl.when(n == 0)
    def _():
        sum_ref[...] = jnp.zeros_like(sum_ref)
        sq_ref[...] = jnp.zeros_like(sq_ref)
        maxh_ref[...] = jnp.full_like(maxh_ref, -jnp.inf)
        minh_ref[...] = jnp.full_like(minh_ref, jnp.inf)

    sum_ref[...] += jnp.sum(h3, axis=0, keepdims=True)[None]
    sq_ref[...] += jnp.sum(h3 * h3, axis=0, keepdims=True)[None]
    maxh_ref[...] = jnp.maximum(maxh_ref[...],
                                jnp.max(h3, axis=0, keepdims=True)[None])
    minh_ref[...] = jnp.minimum(minh_ref[...],
                                jnp.min(h3, axis=0, keepdims=True)[None])


# ---------------------------------------------------------------------------
# head: pooled -> fc1/bn4/relu -> fc2/bn5/relu -> fc3 (+identity, lane-padded)
# ---------------------------------------------------------------------------
def _bn_relu_fused(y, gamma, beta):
    """Training-mode BN folded into one per-channel scale/shift, then ReLU."""
    mean = jnp.mean(y, axis=0, keepdims=True)
    var = jnp.mean(y * y, axis=0, keepdims=True) - mean * mean
    scale = gamma * jax.lax.rsqrt(var + EPS)
    shift = beta - mean * scale
    return jnp.maximum(y * scale + shift, 0.0)


def _head_kernel(maxh_ref, minh_ref, sc3_ref, sh3_ref,
                 wf1_ref, g4_ref, be4_ref, wf2_ref, g5_ref, be5_ref,
                 wf3_ref, bf3_ref, out_ref):
    sc3 = sc3_ref[...]
    sh3 = sh3_ref[...]
    # max_n relu(s*h + t) == relu(s*max_n(h) + t) if s >= 0 else relu(s*min_n(h) + t)
    pooled = jnp.maximum(
        jnp.where(sc3 >= 0.0, maxh_ref[...] * sc3, minh_ref[...] * sc3) + sh3,
        0.0)                                                        # (B, 1024)
    h = jnp.dot(pooled, wf1_ref[...], preferred_element_type=jnp.float32)
    h = _bn_relu_fused(h, g4_ref[...], be4_ref[...])                # (B, 512)
    h = jnp.dot(h, wf2_ref[...], preferred_element_type=jnp.float32)
    h = _bn_relu_fused(h, g5_ref[...], be5_ref[...])                # (B, 256)
    out_ref[...] = (jnp.dot(h, wf3_ref[...], preferred_element_type=jnp.float32)
                    + bf3_ref[...])                                 # (B, 128) lane-dense


# ---------------------------------------------------------------------------
# wrapper
# ---------------------------------------------------------------------------
def _bn_scale_shift(s, sq, gamma, beta, count):
    """Fold training-mode BN into per-channel scale/shift from sum / sum-sq."""
    mean = jnp.sum(s, axis=0) / count                 # (1, C)
    var = jnp.sum(sq, axis=0) / count - mean * mean
    scale = gamma * jax.lax.rsqrt(var + EPS)
    shift = beta - mean * scale
    return scale, shift


def t_net_forward(x, params, *, use_bf16_mxu=False, tile_cap=1024):
    """x: (B, 3, N) float32 -> (B, 3, 3) float32 (training-mode BatchNorm)."""
    (w1, b1, g1, be1, w2, b2, g2, be2, w3, b3, g3, be3,
     wf1, bf1, g4, be4, wf2, bf2, g5, be5, wf3, bf3) = params
    del b1, b2, b3, bf1, bf2   # pre-BN biases cancel exactly in training-mode BN
    B, C, N = x.shape
    assert C == 3

    x_bnc = jnp.transpose(x, (0, 2, 1))               # (B, N, 3) channels-last
    tile_n = _choose_tile(N, tile_cap)
    grid = (B, N // tile_n)
    count = float(B * N)
    f32 = jnp.float32

    x_spec = pl.BlockSpec((1, tile_n, 3), lambda b, n: (b, n, 0))

    def const_spec(shape):                            # weights resident in VMEM
        return pl.BlockSpec(shape, lambda b, n: (0,) * len(shape))

    def acc_spec(c):                                  # per-b accumulator output
        return pl.BlockSpec((1, 1, c), lambda b, n: (b, 0, 0))

    def acc_shape(c):
        return jax.ShapeDtypeStruct((B, 1, c), f32)

    cparams = pltpu.CompilerParams(
        dimension_semantics=("parallel", "arbitrary"),  # B across cores, N carries acc
        vmem_limit_bytes=VMEM_LIMIT)

    # ---- pass 1: conv1 batch statistics -----------------------------------
    sum1, sq1 = pl.pallas_call(
        _conv1_stats_kernel,
        grid=grid,
        in_specs=[x_spec, const_spec(w1.shape)],
        out_specs=(acc_spec(64), acc_spec(64)),
        out_shape=(acc_shape(64), acc_shape(64)),
        compiler_params=cparams,
        cost_estimate=pl.CostEstimate(
            flops=int(2 * B * N * 3 * 64), transcendentals=0,
            bytes_accessed=int(x_bnc.size * 4)),
    )(x_bnc, w1)
    sc1, sh1 = _bn_scale_shift(sum1, sq1, g1, be1, count)

    # ---- pass 2: bn1+relu -> conv2 batch statistics ------------------------
    sum2, sq2 = pl.pallas_call(
        functools.partial(_conv2_stats_kernel, use_bf16=use_bf16_mxu),
        grid=grid,
        in_specs=[x_spec, const_spec(w1.shape), const_spec(sc1.shape),
                  const_spec(sh1.shape), const_spec(w2.shape)],
        out_specs=(acc_spec(128), acc_spec(128)),
        out_shape=(acc_shape(128), acc_shape(128)),
        compiler_params=cparams,
        cost_estimate=pl.CostEstimate(
            flops=int(2 * B * N * (3 * 64 + 64 * 128)), transcendentals=0,
            bytes_accessed=int(x_bnc.size * 4)),
    )(x_bnc, w1, sc1, sh1, w2)
    sc2, sh2 = _bn_scale_shift(sum2, sq2, g2, be2, count)

    # ---- pass 3: bn2+relu -> conv3 stats + running per-b max/min -----------
    sum3, sq3, maxh, minh = pl.pallas_call(
        functools.partial(_conv3_pool_kernel, use_bf16=use_bf16_mxu),
        grid=grid,
        in_specs=[x_spec, const_spec(w1.shape), const_spec(sc1.shape),
                  const_spec(sh1.shape), const_spec(w2.shape),
                  const_spec(sc2.shape), const_spec(sh2.shape),
                  const_spec(w3.shape)],
        out_specs=(acc_spec(1024), acc_spec(1024), acc_spec(1024), acc_spec(1024)),
        out_shape=(acc_shape(1024),) * 4,
        compiler_params=cparams,
        cost_estimate=pl.CostEstimate(
            flops=int(2 * B * N * (3 * 64 + 64 * 128 + 128 * 1024)),
            transcendentals=0,
            bytes_accessed=int(x_bnc.size * 4 + 4 * B * 1024 * 4)),
    )(x_bnc, w1, sc1, sh1, w2, sc2, sh2, w3)
    sc3, sh3 = _bn_scale_shift(sum3, sq3, g3, be3, count)

    # ---- head (tiny, runs once): pad fc3 to 128 lanes, fold identity in ----
    iden = jnp.eye(3, dtype=f32).reshape(1, 9)
    wf3_p = jnp.zeros((wf3.shape[0], 128), f32).at[:, :9].set(wf3)
    bf3_p = jnp.zeros((1, 128), f32).at[:, :9].set(bf3 + iden)

    vspec = pl.BlockSpec(memory_space=pltpu.MemorySpace.VMEM)
    head = pl.pallas_call(
        _head_kernel,
        out_shape=jax.ShapeDtypeStruct((B, 128), f32),
        in_specs=[vspec] * 12,
        out_specs=vspec,
        compiler_params=pltpu.CompilerParams(vmem_limit_bytes=VMEM_LIMIT),
    )(maxh.reshape(B, 1024), minh.reshape(B, 1024), sc3, sh3,
      wf1, g4, be4, wf2, g5, be5, wf3_p, bf3_p)

    return head[:, :9].reshape(B, 3, 3)


# ---------------------------------------------------------------------------
# pure-JAX reference (straightforward math, XLA path) for correctness checking
# ---------------------------------------------------------------------------
def t_net_ref(x, params):
    (w1, b1, g1, be1, w2, b2, g2, be2, w3, b3, g3, be3,
     wf1, bf1, g4, be4, wf2, bf2, g5, be5, wf3, bf3) = params
    B, _, N = x.shape

    def bn_relu(y, gamma, beta):
        mean = jnp.mean(y, axis=0, keepdims=True)
        var = jnp.mean(jnp.square(y - mean), axis=0, keepdims=True)
        return jnp.maximum((y - mean) * jax.lax.rsqrt(var + EPS) * gamma + beta, 0.0)

    h = jnp.transpose(x, (0, 2, 1)).reshape(B * N, 3)
    h = bn_relu(h @ w1 + b1, g1, be1)
    h = bn_relu(h @ w2 + b2, g2, be2)
    h = bn_relu(h @ w3 + b3, g3, be3)
    h = jnp.max(h.reshape(B, N, 1024), axis=1)
    h = bn_relu(h @ wf1 + bf1, g4, be4)
    h = bn_relu(h @ wf2 + bf2, g5, be5)
    out = h @ wf3 + bf3
    iden = jnp.eye(3, dtype=jnp.float32).reshape(1, 9)
    return (out + iden).reshape(B, 3, 3)


def init_params(key):
    """Deterministic synthetic parameters (shapes from T_Net.__init__)."""
    layer_dims = [(3, 64), (64, 128), (128, 1024),      # conv1..3 (k=1)
                  (1024, 512), (512, 256), (256, 9)]    # fc1..3
    has_bn = [True, True, True, True, True, False]      # bn1..5 (fc3 has none)
    keys = jax.random.split(key, 4 * len(layer_dims))
    params = []
    for i, ((cin, cout), bn) in enumerate(zip(layer_dims, has_bn)):
        kw, kb, kg, kbe = keys[4 * i: 4 * i + 4]
        w = jax.random.normal(kw, (cin, cout), jnp.float32) / jnp.sqrt(float(cin))
        b = 0.1 * jax.random.normal(kb, (1, cout), jnp.float32)
        params += [w, b]
        if bn:
            gamma = 1.0 + 0.1 * jax.random.normal(kg, (1, cout), jnp.float32)
            beta = 0.1 * jax.random.normal(kbe, (1, cout), jnp.float32)
            params += [gamma, beta]
    return tuple(params)


if __name__ == "__main__":
    key = jax.random.PRNGKey(0)
    kx, kp = jax.random.split(key)

    B, N = 2, 16                       # small point cloud: (B, 3, N)
    x = jax.random.normal(kx, (B, 3, N), dtype=jnp.float32)
    params = init_params(kp)

    ref = t_net_ref(x, params)

    out = jax.block_until_ready(t_net_forward(x, params))          # f32 MXU path
    assert out.shape == (B, 3, 3), out.shape
    assert jnp.allclose(out, ref, rtol=1e-2, atol=1e-2), (
        float(jnp.max(jnp.abs(out - ref))))

    # bf16 MXU-operand path (v6e/v7x option): verify it compiles/runs and is
    # finite.  Training-mode BN over a batch of 2 amplifies bf16 rounding, so
    # an element-wise comparison at this toy batch size is not meaningful.
    out_bf16 = jax.block_until_ready(t_net_forward(x, params, use_bf16_mxu=True))
    assert out_bf16.shape == (B, 3, 3)
    assert bool(jnp.all(jnp.isfinite(out_bf16)))

    print("KERNEL_OK")
</pallas_src>

<mosaic_0001>
module attributes {stable_mosaic.version = 11 : i64} {
  func.func @_conv1_stats_kernel(%arg0: i32, %arg1: i32, %arg2: memref<1x16x3xf32, #tpu.memory_space<vmem>>, %arg3: memref<3x64xf32, #tpu.memory_space<vmem>>, %arg4: memref<1x1x64xf32, #tpu.memory_space<vmem>>, %arg5: memref<1x1x64xf32, #tpu.memory_space<vmem>>) attributes {dimension_semantics = [#tpu.dimension_semantics<parallel>, #tpu.dimension_semantics<arbitrary>], iteration_bounds = array<i64: 2, 1>, scalar_prefetch = 0 : i64, scratch_operands = 0 : i64, tpu.core_type = #tpu.core_type<tc>, window_params = [{transform_indices = @transform_0, window_bounds = array<i64: 1, 16, 3>}, {pipeline_mode = #tpu.pipeline_mode<synchronous>, transform_indices = @transform_1, window_bounds = array<i64: 3, 64>}, {transform_indices = @transform_2, window_bounds = array<i64: 1, 1, 64>}, {transform_indices = @transform_3, window_bounds = array<i64: 1, 1, 64>}]} {
    %c0 = arith.constant 0 : index
    %c0_0 = arith.constant 0 : index
    %c0_1 = arith.constant 0 : index
    %0 = vector.load %arg2[%c0, %c0_0, %c0_1] : memref<1x16x3xf32, #tpu.memory_space<vmem>>, vector<1x16x3xf32>
    %1 = vector.shape_cast %0 : vector<1x16x3xf32> to vector<16x3xf32>
    %c0_2 = arith.constant 0 : index
    %c0_3 = arith.constant 0 : index
    %2 = vector.load %arg3[%c0_2, %c0_3] : memref<3x64xf32, #tpu.memory_space<vmem>>, vector<3x64xf32>
    %3 = vector.extract_strided_slice %1 {offsets = [0, 0], sizes = [16, 1], strides = [1, 1]} : vector<16x3xf32> to vector<16x1xf32>
    %4 = vector.extract_strided_slice %2 {offsets = [0, 0], sizes = [1, 64], strides = [1, 1]} : vector<3x64xf32> to vector<1x64xf32>
    %5 = vector.broadcast %3 : vector<16x1xf32> to vector<16x64xf32>
    %6 = vector.broadcast %4 : vector<1x64xf32> to vector<16x64xf32>
    %7 = arith.mulf %5, %6 : vector<16x64xf32>
    %8 = vector.extract_strided_slice %1 {offsets = [0, 1], sizes = [16, 1], strides = [1, 1]} : vector<16x3xf32> to vector<16x1xf32>
    %9 = vector.extract_strided_slice %2 {offsets = [1, 0], sizes = [1, 64], strides = [1, 1]} : vector<3x64xf32> to vector<1x64xf32>
    %10 = vector.broadcast %8 : vector<16x1xf32> to vector<16x64xf32>
    %11 = vector.broadcast %9 : vector<1x64xf32> to vector<16x64xf32>
    %12 = arith.mulf %10, %11 : vector<16x64xf32>
    %13 = arith.addf %7, %12 : vector<16x64xf32>
    %14 = vector.extract_strided_slice %1 {offsets = [0, 2], sizes = [16, 1], strides = [1, 1]} : vector<16x3xf32> to vector<16x1xf32>
    %15 = vector.extract_strided_slice %2 {offsets = [2, 0], sizes = [1, 64], strides = [1, 1]} : vector<3x64xf32> to vector<1x64xf32>
    %16 = vector.broadcast %14 : vector<16x1xf32> to vector<16x64xf32>
    %17 = vector.broadcast %15 : vector<1x64xf32> to vector<16x64xf32>
    %18 = arith.mulf %16, %17 : vector<16x64xf32>
    %19 = arith.addf %13, %18 : vector<16x64xf32>
    %c0_i32 = arith.constant 0 : i32
    %20 = arith.cmpi eq, %arg1, %c0_i32 : i32
    %21 = arith.extui %20 : i1 to i32
    %c0_i32_4 = arith.constant 0 : i32
    %22 = arith.cmpi ne, %21, %c0_i32_4 : i32
    scf.if %22 {
      %cst_18 = arith.constant 0.000000e+00 : f32
      %36 = vector.broadcast %cst_18 : f32 to vector<1x1x64xf32>
      %c0_19 = arith.constant 0 : index
      %c0_20 = arith.constant 0 : index
      %c0_21 = arith.constant 0 : index
      %37 = vector.load %arg4[%c0_19, %c0_20, %c0_21] : memref<1x1x64xf32, #tpu.memory_space<vmem>>, vector<1x1x64xf32>
      tpu.vector_store %arg4[%c0_19, %c0_20, %c0_21], %36 {strides = array<i32>} : memref<1x1x64xf32, #tpu.memory_space<vmem>>, vector<1x1x64xf32>,
      %cst_22 = arith.constant 0.000000e+00 : f32
      %38 = vector.broadcast %cst_22 : f32 to vector<1x1x64xf32>
      %c0_23 = arith.constant 0 : index
      %c0_24 = arith.constant 0 : index
      %c0_25 = arith.constant 0 : index
      %39 = vector.load %arg5[%c0_23, %c0_24, %c0_25] : memref<1x1x64xf32, #tpu.memory_space<vmem>>, vector<1x1x64xf32>
      tpu.vector_store %arg5[%c0_23, %c0_24, %c0_25], %38 {strides = array<i32>} : memref<1x1x64xf32, #tpu.memory_space<vmem>>, vector<1x1x64xf32>,
    } else {
    }
    %c0_5 = arith.constant 0 : index
    %c0_6 = arith.constant 0 : index
    %c0_7 = arith.constant 0 : index
    %23 = vector.load %arg4[%c0_5, %c0_6, %c0_7] : memref<1x1x64xf32, #tpu.memory_space<vmem>>, vector<1x1x64xf32>
    %cst = arith.constant dense<0.000000e+00> : vector<64xf32>
    %24 = vector.multi_reduction <add>, %19, %cst [0] : vector<16x64xf32> to vector<64xf32>
    %25 = vector.shape_cast %24 : vector<64xf32> to vector<1x64xf32>
    %26 = vector.shape_cast %25 : vector<1x64xf32> to vector<1x1x64xf32>
    %27 = arith.addf %23, %26 : vector<1x1x64xf32>
    %c0_8 = arith.constant 0 : index
    %c0_9 = arith.constant 0 : index
    %c0_10 = arith.constant 0 : index
    %28 = vector.load %arg4[%c0_8, %c0_9, %c0_10] : memref<1x1x64xf32, #tpu.memory_space<vmem>>, vector<1x1x64xf32>
    tpu.vector_store %arg4[%c0_8, %c0_9, %c0_10], %27 {strides = array<i32>} : memref<1x1x64xf32, #tpu.memory_space<vmem>>, vector<1x1x64xf32>,
    %c0_11 = arith.constant 0 : index
    %c0_12 = arith.constant 0 : index
    %c0_13 = arith.constant 0 : index
    %29 = vector.load %arg5[%c0_11, %c0_12, %c0_13] : memref<1x1x64xf32, #tpu.memory_space<vmem>>, vector<1x1x64xf32>
    %30 = arith.mulf %19, %19 : vector<16x64xf32>
    %cst_14 = arith.constant dense<0.000000e+00> : vector<64xf32>
    %31 = vector.multi_reduction <add>, %30, %cst_14 [0] : vector<16x64xf32> to vector<64xf32>
    %32 = vector.shape_cast %31 : vector<64xf32> to vector<1x64xf32>
    %33 = vector.shape_cast %32 : vector<1x64xf32> to vector<1x1x64xf32>
    %34 = arith.addf %29, %33 : vector<1x1x64xf32>
    %c0_15 = arith.constant 0 : index
    %c0_16 = arith.constant 0 : index
    %c0_17 = arith.constant 0 : index
    %35 = vector.load %arg5[%c0_15, %c0_16, %c0_17] : memref<1x1x64xf32, #tpu.memory_space<vmem>>, vector<1x1x64xf32>
    tpu.vector_store %arg5[%c0_15, %c0_16, %c0_17], %34 {strides = array<i32>} : memref<1x1x64xf32, #tpu.memory_space<vmem>>, vector<1x1x64xf32>,
    return
  }
  func.func @transform_0(%arg0: i32, %arg1: i32) -> (i32, i32, i32) {
    %c0_i32 = arith.constant 0 : i32
    %c0_i32_0 = arith.constant 0 : i32
    return %arg0, %arg1, %c0_i32 : i32, i32, i32
  }
  func.func @transform_1(%arg0: i32, %arg1: i32) -> (i32, i32) {
    %c0_i32 = arith.constant 0 : i32
    %c0_i32_0 = arith.constant 0 : i32
    %c0_i32_1 = arith.constant 0 : i32
    return %c0_i32, %c0_i32_0 : i32, i32
  }
  func.func @transform_2(%arg0: i32, %arg1: i32) -> (i32, i32, i32) {
    %c0_i32 = arith.constant 0 : i32
    %c0_i32_0 = arith.constant 0 : i32
    %c0_i32_1 = arith.constant 0 : i32
    return %arg0, %c0_i32, %c0_i32_0 : i32, i32, i32
  }
  func.func @transform_3(%arg0: i32, %arg1: i32) -> (i32, i32, i32) {
    %c0_i32 = arith.constant 0 : i32
    %c0_i32_0 = arith.constant 0 : i32
    %c0_i32_1 = arith.constant 0 : i32
    return %arg0, %c0_i32, %c0_i32_0 : i32, i32, i32
  }
}

</mosaic_0001>

<llo_original>
// kernel: tpu_custom_call.1
$region0: #{tpu_custom_call.1}
  #allocation0 [shape = 'u32[]', space=smem, size = 0x4, offset = 0x4, fixed_abs, tag = 'smem constant byte address 0x4 - core index']
  #allocation1 [shape = 'u32[72,128]{1,0:T(1,128)}', space=vmem, size = 0x9000, scoped, tag = 'internal scratch']
  %s0 = inlined_call_operand.vmem [shape: f32[2,16,3], index: 0, kind: input, shape index: {}]
  %s1 = inlined_call_operand.vmem [shape: f32[3,64], index: 1, kind: input, shape index: {}]
  %s2 = inlined_call_operand.hbm [shape: f32[2,1,64], index: 2, kind: output, shape index: {0}]
  %s3 = inlined_call_operand.hbm [shape: f32[2,1,64], index: 3, kind: output, shape index: {1}]
  %4 = xla_tuple %s2, %s3
  %s5 = sld [smem:[#allocation0]]
  $region53: #{tpu_custom_call.1} parent=0
    _
  %s7 = ssub.s32 1, %s5
  %s8 = scalar_select 0, %s7, %s5
  $region1: #{tpu_custom_call.1} parent=0
    #allocation2 [shape = 'u8[1024]{0}', space=vmem, size = 0x400, scoped, tag = 'output window, operand 0']
    #allocation3 [shape = 's32[2]{0}', space=sflag, size = 0x8, scoped, tag = 'scoped memory for tpu_custom_call.1']
    #allocation4 [shape = 'u8[1024]{0}', space=vmem, size = 0x400, scoped, tag = 'output window, operand 1']
    #allocation5 [shape = 's32[2]{0}', space=sflag, size = 0x8, scoped, tag = 'scoped memory for tpu_custom_call.1']
    %9 = vsyncpa [#allocation3], 0
    %s10 = scalar_lea.sflag [#allocation3], 1
    %11 = vsyncpa %s10, 0
    %12 = vsyncpa [#allocation5], 0
    %s13 = scalar_lea.sflag [#allocation5], 1
    %14 = vsyncpa %s13, 0
    loop: start=0, step=1, limit=4
    $region2: #{tpu_custom_call.1} parent=1 // loop_pre_header
      _
    $region3: #{tpu_custom_call.1} parent=1 // loop_header
      %s16 = sphi 0, %s20
      %p17 = scmp.ge.s32.totalorder %s16, 4
      %s23 = sphi 0, %s35
      %s24 = sphi 0, %s31
      %s25 = sphi 0, %s23
      %s26 = sphi 0, %s24
      %s27 = sphi 0, %s25
      %s28 = sphi 0, %s26
      %s40 = sphi 0, %s42
      %s43 = sphi 0, %s40
      %s44 = sphi 0, %s43
      %s60 = sphi 0, %s44
      %s64 = sphi 0, %s64
      %s66 = sphi 0, %s64
      %s67 = sphi 0, %s66
      %s81 = sphi 0, %s67
      %s87 = sphi 0, %s89
      %s90 = sphi 0, %s87
      %s91 = sphi 0, %s90
      %s107 = sphi 0, %s91
      %s113 = sphi 0, %s115
      %s116 = sphi 0, %s113
      %s117 = sphi 0, %s116
      %s133 = sphi 0, %s117
    $region4: #{tpu_custom_call.1} parent=1 // loop_header_branch
      %19 = sbr.rel (%p17) target = $region8
    $region5: #{tpu_custom_call.1} parent=1 // loop_body
      %s21 = ssub.s32 %s16, 1
      %s22 = ssub.s32 %s16, 2
      %s29 = sadd.s32 1, %s24
      %p30 = scmp.ge.s32.totalorder %s29, 1
      %s31 = scalar_select %p30, 0, %s29
      %s32 = sadd.s32 1, %s23
      %s33 = scalar_select %p30, %s32, %s23
      %p34 = scmp.ge.s32.totalorder %s33, 2
      %s35 = scalar_select %p34, 0, %s33
      %s36 = ssub.s32 %s23, %s35
      %s37 = ssub.s32 %s24, %s31
      %s38 = sor.u32 %s36, %s37
      %p39 = scmp.eq.s32.totalorder %s38, 0
      %s41 = sadd.s32 %s40, 1
      %s42 = scalar_select %p39, %s40, %s41
      %p45 = pneg %p39
      %p46 = scmp.eq.s32.totalorder %s16, 1
      %p47 = por %p45, %p46
      %p48 = scmp.ne.s32.totalorder %s40, %s43
      %p49 = scmp.eq.s32.totalorder %s16, 0
      %p50 = por %p48, %p49
      %p51 = scmp.ne.s32.totalorder %s40, %s43
      %p52 = scmp.eq.s32.totalorder %s21, 1
      %p53 = por %p51, %p52
      %p54 = scmp.ne.s32.totalorder %s43, %s44
      %p55 = scmp.eq.s32.totalorder %s21, 0
      %p56 = por %p54, %p55
      %p57 = scmp.ne.s32.totalorder %s43, %s44
      %p58 = scmp.eq.s32.totalorder %s22, 1
      %p59 = por %p57, %p58
      %p61 = scmp.ne.s32.totalorder %s44, %s60
      %p62 = scmp.eq.s32.totalorder %s22, 0
      %p63 = por %p61, %p62
      %s65 = sadd.s32 %s64, 1
      %p68 = scmp.eq.s32.totalorder %s16, 1
      %p69 = scmp.ne.s32.totalorder %s64, %s66
      %p70 = scmp.eq.s32.totalorder %s16, 0
      %p71 = por %p69, %p70
      %p72 = scmp.ne.s32.totalorder %s64, %s66
      %p73 = scmp.eq.s32.totalorder %s21, 1
      %p74 = por %p72, %p73
      %p75 = scmp.ne.s32.totalorder %s66, %s67
      %p76 = scmp.eq.s32.totalorder %s21, 0
      %p77 = por %p75, %p76
      %p78 = scmp.ne.s32.totalorder %s66, %s67
      %p79 = scmp.eq.s32.totalorder %s22, 1
      %p80 = por %p78, %p79
      %p82 = scmp.ne.s32.totalorder %s67, %s81
      %p83 = scmp.eq.s32.totalorder %s22, 0
      %p84 = por %p82, %p83
      %s85 = ssub.s32 %s23, %s35
      %p86 = scmp.eq.s32.totalorder %s85, 0
      %s88 = sadd.s32 %s87, 1
      %s89 = scalar_select %p86, %s87, %s88
      %p92 = pneg %p86
      %p93 = scmp.eq.s32.totalorder %s16, 1
      %p94 = por %p92, %p93
      %p95 = scmp.ne.s32.totalorder %s87, %s90
      %p96 = scmp.eq.s32.totalorder %s16, 0
      %p97 = por %p95, %p96
      %p98 = scmp.ne.s32.totalorder %s87, %s90
      %p99 = scmp.eq.s32.totalorder %s21, 1
      %p100 = por %p98, %p99
      %p101 = scmp.ne.s32.totalorder %s90, %s91
      %p102 = scmp.eq.s32.totalorder %s21, 0
      %p103 = por %p101, %p102
      %p104 = scmp.ne.s32.totalorder %s90, %s91
      %p105 = scmp.eq.s32.totalorder %s22, 1
      %p106 = por %p104, %p105
      %p108 = scmp.ne.s32.totalorder %s91, %s107
      %p109 = scmp.eq.s32.totalorder %s22, 0
      %p110 = por %p108, %p109
      %s111 = ssub.s32 %s23, %s35
      %p112 = scmp.eq.s32.totalorder %s111, 0
      %s114 = sadd.s32 %s113, 1
      %s115 = scalar_select %p112, %s113, %s114
      %p118 = pneg %p112
      %p119 = scmp.eq.s32.totalorder %s16, 1
      %p120 = por %p118, %p119
      %p121 = scmp.ne.s32.totalorder %s113, %s116
      %p122 = scmp.eq.s32.totalorder %s16, 0
      %p123 = por %p121, %p122
      %p124 = scmp.ne.s32.totalorder %s113, %s116
      %p125 = scmp.eq.s32.totalorder %s21, 1
      %p126 = por %p124, %p125
      %p127 = scmp.ne.s32.totalorder %s116, %s117
      %p128 = scmp.eq.s32.totalorder %s21, 0
      %p129 = por %p127, %p128
      %p130 = scmp.ne.s32.totalorder %s116, %s117
      %p131 = scmp.eq.s32.totalorder %s22, 1
      %p132 = por %p130, %p131
      %p134 = scmp.ne.s32.totalorder %s117, %s133
      %p135 = scmp.eq.s32.totalorder %s22, 0
      %p136 = por %p134, %p135
      %p137 = scmp.le.s32.totalorder 1, %s16
      %p138 = scmp.lt.s32.totalorder %s16, 3
      %p139 = pnand %p137, %p138
      %p140 = pneg %p139
      // Predicated region
      $region9: #{tpu_custom_call.1} parent=5 // pred_check
        _
      $region10: #{tpu_custom_call.1} parent=5 // pred_check_branch
        %142 = sbr.rel (%p139) target = $region12
      $region11: #{tpu_custom_call.1} parent=5 // pred_region
        %s143 = ssub.s32 %s16, 1
        // Predicated region
        $region13: #{tpu_custom_call.1} parent=11 // pred_check
          %p144 = pneg %p77
        $region14: #{tpu_custom_call.1} parent=11 // pred_check_branch
          %146 = sbr.rel (%p144) target = $region16
        $region15: #{tpu_custom_call.1} parent=11 // pred_region
          _
        $region16: #{tpu_custom_call.1} parent=11 // pred_fallthru
          _
      $region12: #{tpu_custom_call.1} parent=5 // pred_fallthru
        _
      %p147 = scmp.lt.s32.totalorder %s16, 2
      // Predicated region
      $region17: #{tpu_custom_call.1} parent=5 // pred_check
        %p148 = pneg %p147
      $region18: #{tpu_custom_call.1} parent=5 // pred_check_branch
        %150 = sbr.rel (%p148) target = $region20
      $region19: #{tpu_custom_call.1} parent=5 // pred_region
        // Predicated region
        $region21: #{tpu_custom_call.1} parent=19 // pred_check
          %p151 = pneg %p50
        $region22: #{tpu_custom_call.1} parent=19 // pred_check_branch
          %153 = sbr.rel (%p151) target = $region24
        $region23: #{tpu_custom_call.1} parent=19 // pred_region
          %s154 = smul.u32 2, %s24
          %p155 = scmp.lt.s32.totalorder %s23, 1
          %s156 = scalar_select %p155, %s23, 1
          %p157 = scmp.lt.s32.totalorder %s154, 1
          %s158 = scalar_select %p157, %s154, 1
          %s159 = smul.addr %s156, 2
          %s160 = sadd.s32 %s158, %s159
          %s161 = smul.addr %s160, 8
          %s162 = scalar_lea.vmem %s0, %s161
          %s163 = smul.u32 2, %s24
        $region24: #{tpu_custom_call.1} parent=19 // pred_fallthru
          _
      $region20: #{tpu_custom_call.1} parent=5 // pred_fallthru
        _
      %p164 = scmp.le.s32.totalorder 1, %s16
      %p165 = scmp.lt.s32.totalorder %s16, 3
      %p166 = pnand %p164, %p165
      %p167 = pneg %p166
      // Predicated region
      $region25: #{tpu_custom_call.1} parent=5 // pred_check
        _
      $region26: #{tpu_custom_call.1} parent=5 // pred_check_branch
        %169 = sbr.rel (%p166) target = $region28
      $region27: #{tpu_custom_call.1} parent=5 // pred_region
        %s170 = ssub.s32 %s16, 1
        %s171 = smul.u32 2, %s26
        %p172 = scmp.lt.s32.totalorder %s25, 1
        %s173 = scalar_select %p172, %s25, 1
        %p174 = scmp.lt.s32.totalorder %s171, 1
        %s175 = scalar_select %p174, %s171, 1
        %s176 = smul.addr %s173, 2
        %s177 = sadd.s32 %s175, %s176
        %s178 = smul.addr %s177, 8
        %s179 = scalar_lea.vmem %s0, %s178
        %p180 = pneg %p56
        %p181 = pneg %p53
        %p182 = pneg %p77
        %p183 = pneg %p74
        %p184 = pneg %p103
        %p185 = pneg %p100
        %s186 = sand.u32 %s90, 1
        %s187 = scalar_lea.sflag [#allocation3], %s186
        %s188 = sand.u32 %s90, 1
        %s189 = scalar_lea.vmem [#allocation2], %s188
        %p190 = pneg %p129
        %p191 = pneg %p126
        %s192 = sand.u32 %s116, 1
        %s193 = scalar_lea.sflag [#allocation5], %s192
        %s194 = sand.u32 %s116, 1
        %s195 = scalar_lea.vmem [#allocation4], %s194
        %s196 = smul.u32 2, %s26
        %p197 = scmp.lt.s32.totalorder %s25, 1
        %s198 = scalar_select %p197, %s25, 1
        %p199 = scmp.lt.s32.totalorder %s196, 1
        %s200 = scalar_select %p199, %s196, 1
        %s201 = smul.addr %s198, 2
        %s202 = sadd.s32 %s200, %s201
        %s203 = smul.addr %s202, 8
        %s204 = scalar_lea.vmem %s0, %s203
        %s205 = smul.u32 2, %s26
        %v206 = vld [vmem:[%s204] sm:$0xff]
        %v207 = vld [vmem:[%s204 + $0x8] sm:$0xff]
        %v208 = vld [vmem:[%s1] sm:$0x7]
        %210 = vset.pattern.permute.xlu0 0
        %211 = vperm.xlu0 %210, %v206
        %v212 = vpop.permute.xlu0 %211
        %215 = vset.pattern.permute.xlu0 0
        %216 = vperm.xlu0 %215, %v207
        %v217 = vpop.permute.xlu0 %216
        %v219 = vperm.slane %v208, 0
        %v220 = vmul.f32 %v212, %v219
        %v221 = vmul.f32 %v217, %v219
        %222 = vset.pattern.permute.xlu0 1
        %223 = vperm.xlu0 %222, %v206
        %v224 = vpop.permute.xlu0 %223
        %226 = vset.pattern.permute.xlu0 1
        %227 = vperm.xlu0 %226, %v207
        %v228 = vpop.permute.xlu0 %227
        %v230 = vperm.slane %v208, 1
        %v231 = vmul.f32 %v224, %v230
        %v232 = vmul.f32 %v228, %v230
        %v233 = vadd.f32 %v220, %v231
        %v234 = vadd.f32 %v221, %v232
        %235 = vset.pattern.permute.xlu0 2
        %236 = vperm.xlu0 %235, %v206
        %v237 = vpop.permute.xlu0 %236
        %239 = vset.pattern.permute.xlu0 2
        %240 = vperm.xlu0 %239, %v207
        %v241 = vpop.permute.xlu0 %240
        %v243 = vperm.slane %v208, 2
        %v244 = vmul.f32 %v237, %v243
        %v245 = vmul.f32 %v241, %v243
        %v246 = vadd.f32 %v233, %v244
        %v247 = vadd.f32 %v234, %v245
        %p248 = scmp.eq.s32.totalorder %s26, 0
        // Predicated region
        $region29: #{tpu_custom_call.1} parent=27 // pred_check
          %p249 = pneg %p248
        $region30: #{tpu_custom_call.1} parent=27 // pred_check_branch
          %251 = sbr.rel (%p249) target = $region32
        $region31: #{tpu_custom_call.1} parent=27 // pred_region
          %vm252 = vcmask 516096
          %253 = vst.msk [vmem:[%s189] sm:$0x1] %vm252, 0.0
          %254 = vst.msk [vmem:[%s195] sm:$0x1] %vm252, 0.0
        $region32: #{tpu_custom_call.1} parent=27 // pred_fallthru
          _
        %v255 = vld [vmem:[%s189] sm:$0x1]
        %vm256 = vcmask 523264
        %v257 = vsel %vm256, %v246, 0.0
        %v258 = vsel %vm256, %v247, 0.0
        %v259 = vadd.f32 %v257, %v258
        %v260 = vrot.slane %v259, 4
        %v261 = vadd.f32 %v259, %v260
        %v262 = vrot.slane %v261, 2
        %v263 = vadd.f32 %v261, %v262
        %v264 = vrot.slane %v263, 1
        %v265 = vadd.f32 %v263, %v264
        %v266 = vadd.f32 %v255, %v265
        %vm267 = vcmask 516096
        %268 = vst.msk [vmem:[%s189] sm:$0x1] %vm267, %v266
        %v269 = vld [vmem:[%s195] sm:$0x1]
        %v270 = vmul.f32 %v246, %v246
        %v271 = vmul.f32 %v247, %v247
        %v272 = vsel %vm256, %v270, 0.0
        %v273 = vsel %vm256, %v271, 0.0
        %v274 = vadd.f32 %v272, %v273
        %v275 = vrot.slane %v274, 4
        %v276 = vadd.f32 %v274, %v275
        %v277 = vrot.slane %v276, 2
        %v278 = vadd.f32 %v276, %v277
        %v279 = vrot.slane %v278, 1
        %v280 = vadd.f32 %v278, %v279
        %v281 = vadd.f32 %v269, %v280
        %282 = vst.msk [vmem:[%s195] sm:$0x1] %vm267, %v281
        %s283 = sand.u32 %s90, 1
        %s284 = scalar_lea.sflag [#allocation3], %s283
        %s285 = sand.u32 %s90, 1
        %s286 = scalar_lea.vmem [#allocation2], %s285
        %s287 = sand.u32 %s116, 1
        %s288 = scalar_lea.sflag [#allocation5], %s287
        %s289 = sand.u32 %s116, 1
        %s290 = scalar_lea.vmem [#allocation4], %s289
        // Predicated region
        $region33: #{tpu_custom_call.1} parent=27 // pred_check
          %p291 = pneg %p100
        $region34: #{tpu_custom_call.1} parent=27 // pred_check_branch
          %293 = sbr.rel (%p291) target = $region36
        $region35: #{tpu_custom_call.1} parent=27 // pred_region
          %295 = vsyncadd %s284, 0
          %s296 = scalar_lea.hbm %s2, %s25
          %s298 = sshll.u32 %s286, 4
          %s299 = int_to_ptr.vmem [resolvable:$true] %s298
          %s300 = sshll.u32 %s296, 4
          %s301 = int_to_ptr.hbm [resolvable:$true] %s300
          %303 = dma.vmem_to_hbm [thread:$0]  %s299, 16, %s301, %s284
        $region36: #{tpu_custom_call.1} parent=27 // pred_fallthru
          _
        // Predicated region
        $region37: #{tpu_custom_call.1} parent=27 // pred_check
          %p304 = pneg %p126
        $region38: #{tpu_custom_call.1} parent=27 // pred_check_branch
          %306 = sbr.rel (%p304) target = $region40
        $region39: #{tpu_custom_call.1} parent=27 // pred_region
          %308 = vsyncadd %s288, 0
          %s309 = scalar_lea.hbm %s3, %s25
          %s311 = sshll.u32 %s290, 4
          %s312 = int_to_ptr.vmem [resolvable:$true] %s311
          %s313 = sshll.u32 %s309, 4
          %s314 = int_to_ptr.hbm [resolvable:$true] %s313
          %316 = dma.vmem_to_hbm [thread:$0]  %s312, 16, %s314, %s288
        $region40: #{tpu_custom_call.1} parent=27 // pred_fallthru
          _
      $region28: #{tpu_custom_call.1} parent=5 // pred_fallthru
        _
      %p317 = scmp.le.s32.totalorder 2, %s16
      // Predicated region
      $region41: #{tpu_custom_call.1} parent=5 // pred_check
        %p318 = pneg %p317
      $region42: #{tpu_custom_call.1} parent=5 // pred_check_branch
        %320 = sbr.rel (%p318) target = $region44
      $region43: #{tpu_custom_call.1} parent=5 // pred_region
        %s321 = ssub.s32 %s16, 2
        // Predicated region
        $region45: #{tpu_custom_call.1} parent=43 // pred_check
          %p322 = pneg %p106
        $region46: #{tpu_custom_call.1} parent=43 // pred_check_branch
          %324 = sbr.rel (%p322) target = $region48
        $region47: #{tpu_custom_call.1} parent=43 // pred_region
          %s325 = sand.u32 %s91, 1
          %s326 = scalar_lea.sflag [#allocation3], %s325
          %s327 = sand.u32 %s91, 1
          %s328 = scalar_lea.vmem [#allocation2], %s327
          %330 = dma.done %s326, 16
        $region48: #{tpu_custom_call.1} parent=43 // pred_fallthru
          _
        // Predicated region
        $region49: #{tpu_custom_call.1} parent=43 // pred_check
          %p331 = pneg %p132
        $region50: #{tpu_custom_call.1} parent=43 // pred_check_branch
          %333 = sbr.rel (%p331) target = $region52
        $region51: #{tpu_custom_call.1} parent=43 // pred_region
          %s334 = sand.u32 %s117, 1
          %s335 = scalar_lea.sflag [#allocation5], %s334
          %s336 = sand.u32 %s117, 1
          %s337 = scalar_lea.vmem [#allocation4], %s336
          %339 = dma.done %s335, 16
        $region52: #{tpu_custom_call.1} parent=43 // pred_fallthru
          _
      $region44: #{tpu_custom_call.1} parent=5 // pred_fallthru
        _
    $region6: #{tpu_custom_call.1} parent=1 // loop_footer
      %s20 = sadd.s32 1, %s16
    $region7: #{tpu_custom_call.1} parent=1 // loop_footer_branch
      %15 = sbr.rel target = $region3
    $region8: #{tpu_custom_call.1} parent=1 // loop_exit
      _
    %340 = vsyncpa [#allocation3], 1
    %s341 = scalar_lea.sflag [#allocation3], 1
    %342 = vsyncpa %s341, 1
    %343 = vsyncpa [#allocation5], 1
    %s344 = scalar_lea.sflag [#allocation5], 1
    %345 = vsyncpa %s344, 1

</llo_original>
